<compile_context>
chip_gen: v5e
topology: v5e:2x2
jax: 0.10.0
libtpu: 0.0.40
codegen_flags: <defaults>
</compile_context>

<pallas_src>
import jax
import jax.numpy as jnp
from jax.experimental import pallas as pl
from jax.experimental.pallas import tpu as pltpu

BN_EPS = 1e-5


def _make_head_kernel(hw, thw):
    rem = hw % thw  # static tail remainder (0 => no masking code emitted)

    def kernel(x_ref, w1_ref, b1_ref, w2_ref, b2_ref, out_ref, acc_ref):
        # x_ref: [TB, C, THW] (input dtype), acc_ref: [TB, C] f32 scratch.
        s = pl.program_id(1)
        n_s = pl.num_programs(1)

        @pl.when(s == 0)
        def _init():
            acc_ref[...] = jnp.zeros_like(acc_ref)

        x = x_ref[...]
        if rem != 0:
            # Only the (single) partial tail tile carries out-of-range lanes;
            # zero them so they never enter the running sum.
            lane = jax.lax.broadcasted_iota(jnp.int32, x.shape, dimension=2)
            keep = jnp.logical_or(s < n_s - 1, lane < rem)
            x = jnp.where(keep, x, jnp.zeros_like(x))

        # Spatial (lane-axis) reduction with an f32 accumulator; the cast is
        # fused into the reduce rather than materializing an f32 tile copy.
        acc_ref[...] += jnp.sum(x, axis=-1, dtype=jnp.float32)

        @pl.when(s == n_s - 1)
        def _finalize():
            # BN(eval) + 1/(H*W) are folded into w1/b1 by the wrapper.
            h = jnp.dot(acc_ref[...], w1_ref[...].astype(jnp.float32),
                        preferred_element_type=jnp.float32) + b1_ref[...]
            h = jnp.maximum(h, 0.0)  # ReLU; Dropout is identity at inference.
            out_ref[...] = (jnp.dot(h, w2_ref[...].astype(jnp.float32),
                                    preferred_element_type=jnp.float32)
                            + b2_ref[...]).astype(out_ref.dtype)

    return kernel


def _largest_tile(n, step, cap):
    """Largest divisor of n that is a multiple of `step` and <= cap (0 if none)."""
    best = 0
    d = step
    limit = min(n, cap)
    while d <= limit:
        if n % d == 0:
            best = d
        d += step
    return best


def _vmem_capacity_bytes():
    try:
        info = pltpu.get_tpu_info()
        cap = getattr(info, "vmem_capacity_bytes", None)
        if cap:
            return int(cap)
    except Exception:
        pass
    return 64 * 1024 * 1024  # conservative (v7x per-TC) default


def classification_head(x_nchw, params, *, block_budget=None):
    """x_nchw: [B, C, H, W]. Returns logits [B, num_classes] (float32)."""
    B, C, H, W = x_nchw.shape
    HW = H * W
    w1, b1, gamma, beta, rm, rv, w2, b2 = params
    hidden = w1.shape[1]
    num_classes = w2.shape[1]

    # NCHW consumed directly: [B, C, HW]; no transpose (free reshape).
    x = x_nchw.reshape(B, C, HW)
    itemsize = jnp.dtype(x.dtype).itemsize

    # Fold eval-mode BatchNorm + pooling scale into linear #1 (one-time, tiny).
    scale = gamma.astype(jnp.float32) * jax.lax.rsqrt(
        rv.astype(jnp.float32) + BN_EPS)                               # [1, hidden]
    wdtype = jnp.bfloat16 if x.dtype == jnp.bfloat16 else jnp.float32
    w1f = (w1.astype(jnp.float32) * scale / HW).astype(wdtype)         # [C, hidden]
    b1f = ((b1.astype(jnp.float32) - rm.astype(jnp.float32)) * scale
           + beta.astype(jnp.float32))                                 # [1, hidden]
    w2f = w2.astype(wdtype)
    b2f = b2.astype(jnp.float32)

    # ---- per-generation VMEM budget -----------------------------------------
    vmem_cap = _vmem_capacity_bytes()
    if vmem_cap >= 96 * 1024 * 1024:       # v5e / v6e: 128 MiB physical VMEM
        default_budget = 16 * 1024 * 1024
        vmem_limit_cap = 64 * 1024 * 1024
    else:                                   # v7x: 64 MiB per TensorCore
        default_budget = 10 * 1024 * 1024
        vmem_limit_cap = 52 * 1024 * 1024
    if block_budget is None:
        block_budget = default_budget

    # ---- batch tile ----------------------------------------------------------
    if B <= 8:
        tb = B
    else:
        cap = 64
        if B >= 16:
            cap = min(cap, B // 2)  # >=2 batch tiles so v7x megacore engages
        tb = _largest_tile(B, 8, cap) or B
    # Shrink tb if even a minimal 128-lane block would blow the budget.
    while tb % 16 == 0 and tb * C * 128 * itemsize > block_budget:
        tb //= 2

    # ---- spatial tile (lane axis): multiple of 128, cdiv grid + masked tail --
    if tb * C * HW * itemsize <= block_budget or HW <= 128:
        thw = HW                     # full spatial extent in one block
    else:
        cap = max(128, block_budget // max(1, tb * C * itemsize))
        thw = min(HW, (cap // 128) * 128)

    n_b = B // tb
    n_s = pl.cdiv(HW, thw)
    grid = (n_b, n_s)

    x_block_bytes = tb * C * thw * itemsize
    param_bytes = sum(int(a.size) * jnp.dtype(a.dtype).itemsize
                      for a in (w1f, b1f, w2f, b2f))
    vmem_limit = int(min(
        vmem_limit_cap,
        max(32 * 1024 * 1024,
            3 * x_block_bytes + 4 * param_bytes + 4 * tb * C + (4 << 20))))

    cost = pl.CostEstimate(
        flops=B * HW * C + 2 * B * C * hidden + 2 * B * hidden * num_classes,
        transcendentals=0,
        bytes_accessed=int(x.size) * itemsize + param_bytes
        + 4 * B * num_classes)

    kernel = _make_head_kernel(HW, thw)

    return pl.pallas_call(
        kernel,
        out_shape=jax.ShapeDtypeStruct((B, num_classes), jnp.float32),
        grid_spec=pltpu.PrefetchScalarGridSpec(
            num_scalar_prefetch=0,
            grid=grid,
            in_specs=[
                pl.BlockSpec((tb, C, thw), lambda b, s: (b, 0, s)),
                pl.BlockSpec(w1f.shape, lambda b, s: (0, 0)),
                pl.BlockSpec(b1f.shape, lambda b, s: (0, 0)),
                pl.BlockSpec(w2f.shape, lambda b, s: (0, 0)),
                pl.BlockSpec(b2f.shape, lambda b, s: (0, 0)),
            ],
            out_specs=pl.BlockSpec((tb, num_classes), lambda b, s: (b, 0)),
            scratch_shapes=[pltpu.VMEM((tb, C), jnp.float32)],
        ),
        compiler_params=pltpu.CompilerParams(
            dimension_semantics=("parallel", "arbitrary"),
            vmem_limit_bytes=vmem_limit),
        cost_estimate=cost,
    )(x, w1f, b1f, w2f, b2f)


def init_params(key, in_channels, num_classes, hidden=32):
    k1, k2, k3, k4 = jax.random.split(key, 4)
    # Linear weights stored already transposed: [in, out].
    w1 = jax.random.normal(k1, (in_channels, hidden), jnp.float32) * 0.1
    b1 = jax.random.normal(k2, (1, hidden), jnp.float32) * 0.01
    gamma = jnp.ones((1, hidden), jnp.float32)       # BN weight
    beta = jnp.zeros((1, hidden), jnp.float32)       # BN bias
    rm = jnp.zeros((1, hidden), jnp.float32)         # BN running_mean
    rv = jnp.ones((1, hidden), jnp.float32)          # BN running_var
    w2 = jax.random.normal(k3, (hidden, num_classes), jnp.float32) * 0.1
    b2 = jax.random.normal(k4, (1, num_classes), jnp.float32) * 0.01
    return (w1, b1, gamma, beta, rm, rv, w2, b2)


def reference(x_nchw, params):
    """Pure-JAX reference for sanity checking (eval-mode semantics)."""
    w1, b1, gamma, beta, rm, rv, w2, b2 = params
    pooled = jnp.mean(x_nchw.astype(jnp.float32), axis=(2, 3))
    h = pooled @ w1 + b1
    h = (h - rm) * jax.lax.rsqrt(rv + BN_EPS) * gamma + beta
    h = jnp.maximum(h, 0.0)
    return h @ w2 + b2


if __name__ == "__main__":
    key = jax.random.PRNGKey(0)
    kx, kp = jax.random.split(key)

    B, C, H, W = 2, 4, 16, 16
    num_classes = 10

    x = jax.random.normal(kx, (B, C, H, W), jnp.float32)
    params = init_params(kp, C, num_classes)

    out = jax.block_until_ready(classification_head(x, params))
    ref = reference(x, params)
    assert out.shape == (B, num_classes)
    assert jnp.allclose(out, ref, atol=1e-4, rtol=1e-4), "mismatch vs reference"

    # Also exercise the streaming path: HW=196 with a tiny block budget forces
    # a 128-lane spatial tile, a 2-step reduction, and the masked tail tile.
    x2 = jax.random.normal(kx, (2, 4, 14, 14), jnp.float32)
    out2 = jax.block_until_ready(
        classification_head(x2, params, block_budget=4096))
    ref2 = reference(x2, params)
    assert jnp.allclose(out2, ref2, atol=1e-4, rtol=1e-4), "mismatch (tiled path)"

    print("KERNEL_OK")
</pallas_src>

<mosaic_0001>
module attributes {stable_mosaic.version = 11 : i64} {
  func.func @kernel(%arg0: i32, %arg1: i32, %arg2: memref<2x4x256xf32, #tpu.memory_space<vmem>>, %arg3: memref<4x32xf32, #tpu.memory_space<vmem>>, %arg4: memref<1x32xf32, #tpu.memory_space<vmem>>, %arg5: memref<32x10xf32, #tpu.memory_space<vmem>>, %arg6: memref<1x10xf32, #tpu.memory_space<vmem>>, %arg7: memref<2x10xf32, #tpu.memory_space<vmem>>, %arg8: memref<2x4xf32, #tpu.memory_space<vmem>>) attributes {dimension_semantics = [#tpu.dimension_semantics<parallel>, #tpu.dimension_semantics<arbitrary>], iteration_bounds = array<i64: 1, 1>, scalar_prefetch = 0 : i64, scratch_operands = 1 : i64, tpu.core_type = #tpu.core_type<tc>, window_params = [{transform_indices = @transform_0, window_bounds = array<i64: 2, 4, 256>}, {pipeline_mode = #tpu.pipeline_mode<synchronous>, transform_indices = @transform_1, window_bounds = array<i64: 4, 32>}, {pipeline_mode = #tpu.pipeline_mode<synchronous>, transform_indices = @transform_2, window_bounds = array<i64: 1, 32>}, {pipeline_mode = #tpu.pipeline_mode<synchronous>, transform_indices = @transform_3, window_bounds = array<i64: 32, 10>}, {pipeline_mode = #tpu.pipeline_mode<synchronous>, transform_indices = @transform_4, window_bounds = array<i64: 1, 10>}, {transform_indices = @transform_5, window_bounds = array<i64: 2, 10>}]} {
    %c0_i32 = arith.constant 0 : i32
    %0 = arith.cmpi eq, %arg1, %c0_i32 : i32
    %1 = arith.extui %0 : i1 to i32
    %c0_i32_0 = arith.constant 0 : i32
    %2 = arith.cmpi ne, %1, %c0_i32_0 : i32
    scf.if %2 {
      %cst_9 = arith.constant 0.000000e+00 : f32
      %11 = vector.broadcast %cst_9 : f32 to vector<2x4xf32>
      %c0_10 = arith.constant 0 : index
      %c0_11 = arith.constant 0 : index
      %12 = vector.load %arg8[%c0_10, %c0_11] : memref<2x4xf32, #tpu.memory_space<vmem>>, vector<2x4xf32>
      tpu.vector_store %arg8[%c0_10, %c0_11], %11 {strides = array<i32>} : memref<2x4xf32, #tpu.memory_space<vmem>>, vector<2x4xf32>,
    } else {
    }
    %c0 = arith.constant 0 : index
    %c0_1 = arith.constant 0 : index
    %c0_2 = arith.constant 0 : index
    %3 = vector.load %arg2[%c0, %c0_1, %c0_2] : memref<2x4x256xf32, #tpu.memory_space<vmem>>, vector<2x4x256xf32>
    %c0_3 = arith.constant 0 : index
    %c0_4 = arith.constant 0 : index
    %4 = vector.load %arg8[%c0_3, %c0_4] : memref<2x4xf32, #tpu.memory_space<vmem>>, vector<2x4xf32>
    %cst = arith.constant dense<0.000000e+00> : vector<2x4xf32>
    %5 = vector.multi_reduction <add>, %3, %cst [2] : vector<2x4x256xf32> to vector<2x4xf32>
    %6 = arith.addf %4, %5 : vector<2x4xf32>
    %c0_5 = arith.constant 0 : index
    %c0_6 = arith.constant 0 : index
    %7 = vector.load %arg8[%c0_5, %c0_6] : memref<2x4xf32, #tpu.memory_space<vmem>>, vector<2x4xf32>
    tpu.vector_store %arg8[%c0_5, %c0_6], %6 {strides = array<i32>} : memref<2x4xf32, #tpu.memory_space<vmem>>, vector<2x4xf32>,
    %c0_i32_7 = arith.constant 0 : i32
    %8 = arith.cmpi eq, %arg1, %c0_i32_7 : i32
    %9 = arith.extui %8 : i1 to i32
    %c0_i32_8 = arith.constant 0 : i32
    %10 = arith.cmpi ne, %9, %c0_i32_8 : i32
    scf.if %10 {
      %c0_9 = arith.constant 0 : index
      %c0_10 = arith.constant 0 : index
      %11 = vector.load %arg8[%c0_9, %c0_10] : memref<2x4xf32, #tpu.memory_space<vmem>>, vector<2x4xf32>
      %c0_11 = arith.constant 0 : index
      %c0_12 = arith.constant 0 : index
      %12 = vector.load %arg3[%c0_11, %c0_12] : memref<4x32xf32, #tpu.memory_space<vmem>>, vector<4x32xf32>
      %cst_13 = arith.constant dense<0.000000e+00> : vector<2x32xf32>
      %13 = tpu.matmul %11, %12, %cst_13 {dimension_numbers = #tpu.dot_dimension_numbers<[1], [0], [0], [1], [0, 0, 1, 1], [], []>} : vector<2x4xf32>, vector<4x32xf32>, vector<2x32xf32> -> vector<2x32xf32>
      %c0_14 = arith.constant 0 : index
      %c0_15 = arith.constant 0 : index
      %14 = vector.load %arg4[%c0_14, %c0_15] : memref<1x32xf32, #tpu.memory_space<vmem>>, vector<1x32xf32>
      %15 = vector.broadcast %14 : vector<1x32xf32> to vector<2x32xf32>
      %16 = arith.addf %13, %15 : vector<2x32xf32>
      %cst_16 = arith.constant 0.000000e+00 : f32
      %17 = vector.broadcast %cst_16 : f32 to vector<2x32xf32>
      %18 = arith.maximumf %16, %17 : vector<2x32xf32>
      %c0_17 = arith.constant 0 : index
      %c0_18 = arith.constant 0 : index
      %19 = vector.load %arg5[%c0_17, %c0_18] : memref<32x10xf32, #tpu.memory_space<vmem>>, vector<32x10xf32>
      %cst_19 = arith.constant dense<0.000000e+00> : vector<2x10xf32>
      %20 = tpu.matmul %18, %19, %cst_19 {dimension_numbers = #tpu.dot_dimension_numbers<[1], [0], [0], [1], [0, 0, 1, 1], [], []>} : vector<2x32xf32>, vector<32x10xf32>, vector<2x10xf32> -> vector<2x10xf32>
      %c0_20 = arith.constant 0 : index
      %c0_21 = arith.constant 0 : index
      %21 = vector.load %arg6[%c0_20, %c0_21] : memref<1x10xf32, #tpu.memory_space<vmem>>, vector<1x10xf32>
      %22 = vector.broadcast %21 : vector<1x10xf32> to vector<2x10xf32>
      %23 = arith.addf %20, %22 : vector<2x10xf32>
      %c0_22 = arith.constant 0 : index
      %c0_23 = arith.constant 0 : index
      %24 = vector.load %arg7[%c0_22, %c0_23] : memref<2x10xf32, #tpu.memory_space<vmem>>, vector<2x10xf32>
      tpu.vector_store %arg7[%c0_22, %c0_23], %23 {strides = array<i32>} : memref<2x10xf32, #tpu.memory_space<vmem>>, vector<2x10xf32>,
    } else {
    }
    return
  }
  func.func @transform_0(%arg0: i32, %arg1: i32) -> (i32, i32, i32) {
    %c0_i32 = arith.constant 0 : i32
    %c0_i32_0 = arith.constant 0 : i32
    return %arg0, %c0_i32, %arg1 : i32, i32, i32
  }
  func.func @transform_1(%arg0: i32, %arg1: i32) -> (i32, i32) {
    %c0_i32 = arith.constant 0 : i32
    %c0_i32_0 = arith.constant 0 : i32
    %c0_i32_1 = arith.constant 0 : i32
    return %c0_i32, %c0_i32_0 : i32, i32
  }
  func.func @transform_2(%arg0: i32, %arg1: i32) -> (i32, i32) {
    %c0_i32 = arith.constant 0 : i32
    %c0_i32_0 = arith.constant 0 : i32
    %c0_i32_1 = arith.constant 0 : i32
    return %c0_i32, %c0_i32_0 : i32, i32
  }
  func.func @transform_3(%arg0: i32, %arg1: i32) -> (i32, i32) {
    %c0_i32 = arith.constant 0 : i32
    %c0_i32_0 = arith.constant 0 : i32
    %c0_i32_1 = arith.constant 0 : i32
    return %c0_i32, %c0_i32_0 : i32, i32
  }
  func.func @transform_4(%arg0: i32, %arg1: i32) -> (i32, i32) {
    %c0_i32 = arith.constant 0 : i32
    %c0_i32_0 = arith.constant 0 : i32
    %c0_i32_1 = arith.constant 0 : i32
    return %c0_i32, %c0_i32_0 : i32, i32
  }
  func.func @transform_5(%arg0: i32, %arg1: i32) -> (i32, i32) {
    %c0_i32 = arith.constant 0 : i32
    %c0_i32_0 = arith.constant 0 : i32
    return %arg0, %c0_i32 : i32, i32
  }
}

</mosaic_0001>

<llo_original>
// kernel: tpu_custom_call.1
$region0: #{tpu_custom_call.1}
  #allocation0 [shape = 'u32[]', space=smem, size = 0x4, offset = 0x4, fixed_abs, tag = 'smem constant byte address 0x4 - core index']
  #allocation1 [shape = 'u32[72,128]{1,0:T(1,128)}', space=vmem, size = 0x9000, scoped, tag = 'internal scratch']
  #allocation2 [shape = 'f32[2,4]{1,0:T(2,128)}', space=vmem, size = 0x400, scoped, tag = 'scratch operand']
  %s0 = inlined_call_operand.vmem [shape: f32[2,4,256], index: 0, kind: input, shape index: {}]
  %s1 = inlined_call_operand.vmem [shape: f32[4,32], index: 1, kind: input, shape index: {}]
  %s2 = inlined_call_operand.vmem [shape: f32[1,32], index: 2, kind: input, shape index: {}]
  %s3 = inlined_call_operand.vmem [shape: f32[32,10], index: 3, kind: input, shape index: {}]
  %s4 = inlined_call_operand.vmem [shape: f32[1,10], index: 4, kind: input, shape index: {}]
  %s5 = inlined_call_operand.hbm [shape: f32[2,10], index: 5, kind: output, shape index: {}]
  %s6 = sld [smem:[#allocation0]]
  $region38: #{tpu_custom_call.1} parent=0
    _
  %s8 = ssub.s32 1, %s6
  %s9 = scalar_select 0, %s8, %s6
  $region1: #{tpu_custom_call.1} parent=0
    #allocation3 [shape = 'u8[1024]{0}', space=vmem, size = 0x400, scoped, tag = 'output window, operand 0, single buffered']
    #allocation4 [shape = 's32[1]{0}', space=sflag, size = 0x4, scoped, tag = 'scoped memory for tpu_custom_call.1']
    %10 = vsyncpa [#allocation4], 0
    // Predicated region
    $region2: #{tpu_custom_call.1} parent=1 // pred_check
      _
    $region3: #{tpu_custom_call.1} parent=1 // pred_check_branch
      %12 = sbr.rel (0) target = $region5
    $region4: #{tpu_custom_call.1} parent=1 // pred_region
      _
    $region5: #{tpu_custom_call.1} parent=1 // pred_fallthru
      _
    // Predicated region
    $region6: #{tpu_custom_call.1} parent=1 // pred_check
      _
    $region7: #{tpu_custom_call.1} parent=1 // pred_check_branch
      %14 = sbr.rel (0) target = $region9
    $region8: #{tpu_custom_call.1} parent=1 // pred_region
      _
    $region9: #{tpu_custom_call.1} parent=1 // pred_fallthru
      _
    // Predicated region
    $region10: #{tpu_custom_call.1} parent=1 // pred_check
      _
    $region11: #{tpu_custom_call.1} parent=1 // pred_check_branch
      %16 = sbr.rel (0) target = $region13
    $region12: #{tpu_custom_call.1} parent=1 // pred_region
      _
    $region13: #{tpu_custom_call.1} parent=1 // pred_fallthru
      _
    // Predicated region
    $region14: #{tpu_custom_call.1} parent=1 // pred_check
      _
    $region15: #{tpu_custom_call.1} parent=1 // pred_check_branch
      %18 = sbr.rel (0) target = $region17
    $region16: #{tpu_custom_call.1} parent=1 // pred_region
      _
    $region17: #{tpu_custom_call.1} parent=1 // pred_fallthru
      _
    // Predicated region
    $region18: #{tpu_custom_call.1} parent=1 // pred_check
      _
    $region19: #{tpu_custom_call.1} parent=1 // pred_check_branch
      %20 = sbr.rel (0) target = $region21
    $region20: #{tpu_custom_call.1} parent=1 // pred_region
      _
    $region21: #{tpu_custom_call.1} parent=1 // pred_fallthru
      _
    %p21 = scmp.eq.s32.totalorder 0, 0
    // Predicated region
    $region22: #{tpu_custom_call.1} parent=1 // pred_check
      %p22 = pneg %p21
    $region23: #{tpu_custom_call.1} parent=1 // pred_check_branch
      %24 = sbr.rel (%p22) target = $region25
    $region24: #{tpu_custom_call.1} parent=1 // pred_region
      %vm25 = vcmask 25600
      %26 = vst.msk [vmem:[#allocation2] sm:$0x3] %vm25, 0.0
    $region25: #{tpu_custom_call.1} parent=1 // pred_fallthru
      _
    %v27 = vld [vmem:[%s0] sm:$0xff]
    %v28 = vld [vmem:[%s0 + $0x8] sm:$0xff]
    %v29 = vld [vmem:[#allocation2] sm:$0x3]
    %32 = vst [vmem:[#allocation1] ss:$2 sm:$0xff] %v27
    %v33 = vld.sshfl [vmem:[#allocation1] sm:$0xff pattern:$0x75316420]
    %v34 = vld.sshfl [vmem:[#allocation1 + $0x8] sm:$0xff pattern:$0x75316420]
    %s35 = scalar_lea.vmem [#allocation1], 16
    %36 = vst [vmem:[%s35] ss:$2 sm:$0xff] %v28
    %v37 = vld.sshfl [vmem:[#allocation1 + $0x10] sm:$0xff pattern:$0x75316420]
    %v38 = vld.sshfl [vmem:[#allocation1 + $0x18] sm:$0xff pattern:$0x75316420]
    %vm43 = vcmask 1043456
    %v44 = vsel %vm43, %v33, 0.0
    %v45 = vsel %vm43, %v34, 0.0
    %v46 = vadd.f32 %v44, %v45
    %47 = vadd.xlane.f32.xlu0 %v46
    %v48 = vpop.xlane.xlu0 %47
    %v49 = vsel %vm43, %v37, 0.0
    %v50 = vsel %vm43, %v38, 0.0
    %v51 = vadd.f32 %v49, %v50
    %52 = vadd.xlane.f32.xlu0 %v51
    %v53 = vpop.xlane.xlu0 %52
    %v56 = vlaneseq
    %v57 = vand.u32 %v56, 127
    %v58 = vperm.slane %v48, %v57
    %v59 = vperm.slane %v53, %v57
    %vm60 = vcmask 1041409
    %v61 = vsel %vm60, %v59, %v58
    %v63 = vadd.f32 %v29, %v61
    %vm64 = vcmask 25600
    %65 = vst.msk [vmem:[#allocation2] sm:$0x3] %vm64, %v63
    // Predicated region
    $region26: #{tpu_custom_call.1} parent=1 // pred_check
      %p66 = pneg %p21
    $region27: #{tpu_custom_call.1} parent=1 // pred_check_branch
      %68 = sbr.rel (%p66) target = $region29
    $region28: #{tpu_custom_call.1} parent=1 // pred_region
      %v69 = vld [vmem:[#allocation2] sm:$0x3]
      %v70 = vld [vmem:[%s1] sm:$0xf]
      %v71 = vld [vmem:[%s2] sm:$0x1]
      %v73 = vperm.slane %v71, 0
      %vm75 = vcmask 31744
      %v77 = vsel %vm75, %v69, 0
      %v80 = vsel %vm43, %v70, 0
      %82 = vmatpush.msra.mxu0 0.0
      %83 = vmatpush.msra.mxu0 0.0
      %84 = vmatpush.msra.mxu0 0.0
      %85 = vmatpush.msra.mxu0 0.0
      %86 = vmatpush.msra.mxu0 0.0
      %87 = vmatpush.msra.mxu0 0.0
      %88 = vmatpush.msra.mxu0 0.0
      %89 = vmatpush.msra.mxu0 0.0
      %90 = vmatpush.msra.mxu0 0.0
      %91 = vmatpush.msra.mxu0 0.0
      %92 = vmatpush.msra.mxu0 0.0
      %93 = vmatpush.msra.mxu0 0.0
      %94 = vmatpush.msra.mxu0 0.0
      %95 = vmatpush.msra.mxu0 0.0
      %96 = vmatpush.msra.mxu0 0.0
      %97 = vmatpush.msra.mxu0 %v80
      %98 = vmatmul.f32.gmra.mxu0 %v77
      %v99 = vpop.f32.mrf.mxu0
      %v100 = vadd.f32 %v73, %v99
      %101 = vdwg.mxu0
      %v102 = vmax.f32 %v100, 0.0
      %v103 = vld [vmem:[%s3] sm:$0xff]
      %v104 = vld [vmem:[%s3 + $0x8] sm:$0xff]
      %v105 = vld [vmem:[%s3 + $0x10] sm:$0xff]
      %v106 = vld [vmem:[%s3 + $0x18] sm:$0xff]
      %v107 = vld [vmem:[%s4] sm:$0x1]
      %v109 = vperm.slane %v107, 0
      %vm111 = vcmask 261120
      %v113 = vsel %vm111, %v102, 0
      %115 = vmatpush.msra.mxu0 0.0
      %116 = vmatpush.msra.mxu0 0.0
      %117 = vmatpush.msra.mxu0 0.0
      %118 = vmatpush.msra.mxu0 0.0
      %119 = vmatpush.msra.mxu0 0.0
      %120 = vmatpush.msra.mxu0 0.0
      %121 = vmatpush.msra.mxu0 0.0
      %122 = vmatpush.msra.mxu0 0.0
      %123 = vmatpush.msra.mxu0 0.0
      %124 = vmatpush.msra.mxu0 0.0
      %125 = vmatpush.msra.mxu0 0.0
      %126 = vmatpush.msra.mxu0 0.0
      %127 = vmatpush.msra.mxu0 %v106
      %128 = vmatpush.msra.mxu0 %v105
      %129 = vmatpush.msra.mxu0 %v104
      %130 = vmatpush.msra.mxu0 %v103
      %131 = vmatmul.f32.gmra.mxu0 %v113
      %v132 = vpop.f32.mrf.mxu0
      %v133 = vadd.f32 %v109, %v132
      %134 = vdwg.mxu0
      %vm135 = vcmask 74752
      %136 = vst.msk [vmem:[#allocation3] sm:$0x3] %vm135, %v133
    $region29: #{tpu_custom_call.1} parent=1 // pred_fallthru
      _
    // Predicated region
    $region30: #{tpu_custom_call.1} parent=1 // pred_check
      _
    $region31: #{tpu_custom_call.1} parent=1 // pred_check_branch
      %138 = sbr.rel (0) target = $region33
    $region32: #{tpu_custom_call.1} parent=1 // pred_region
      %140 = vsyncadd [#allocation4], 0
      %s142 = sshll.u32 [#allocation3], 4
      %s143 = int_to_ptr.vmem [resolvable:$true] %s142
      %s144 = sshll.u32 %s5, 4
      %s145 = int_to_ptr.hbm [resolvable:$true] %s144
      %147 = dma.vmem_to_hbm [thread:$0]  %s143, 32, %s145, [#allocation4]
    $region33: #{tpu_custom_call.1} parent=1 // pred_fallthru
      _
    // Predicated region
    $region34: #{tpu_custom_call.1} parent=1 // pred_check
      _
    $region35: #{tpu_custom_call.1} parent=1 // pred_check_branch
      %149 = sbr.rel (0) target = $region37
    $region36: #{tpu_custom_call.1} parent=1 // pred_region
      %151 = dma.done [#allocation4], 32
    $region37: #{tpu_custom_call.1} parent=1 // pred_fallthru
      _
    %152 = vsyncpa [#allocation4], 1

</llo_original>
